<compile_context>
chip_gen: v7x
topology: tpu7x:2x2x1
jax: 0.10.0
libtpu: 0.0.40
codegen_flags: <defaults>
</compile_context>

<pallas_src>
import jax
import jax.numpy as jnp
from jax.experimental import pallas as pl
from jax.experimental.pallas import tpu as pltpu


def _pooler_kernel(x_ref, w_ref, b_ref, o_ref):
    """One grid step: o[:, n_tile] = tanh(x @ Wt[:, n_tile] + b[n_tile]).

    x_ref : (B_pad, H)   first-token activations (constant block, full K)
    w_ref : (H, TN)      weight in [in, out] layout, N-tile
    b_ref : (1, TN)      bias, N-tile
    o_ref : (B_pad, TN)  output tile
    """
    y = jnp.dot(x_ref[...], w_ref[...], preferred_element_type=jnp.float32)
    o_ref[...] = jnp.tanh(y + b_ref[...].astype(jnp.float32)).astype(o_ref.dtype)


def _pick_tile(dim, target):
    """Largest lane-aligned (multiple-of-128) tile <= target that divides dim.
    Falls back to the full dim, which is always a legal block extent."""
    if dim <= target:
        return dim
    t = (target // 128) * 128
    while t >= 128:
        if dim % t == 0:
            return t
        t -= 128
    return dim


def _pick_tn(h, itemsize, target, vmem_budget):
    """N-tile picker: start from target, shrink while the double-buffered
    weight stream (2 * H * tn * itemsize) would exceed the VMEM budget
    (guards v5e's 16 MiB scoped-VMEM default; leaves headroom on v7x)."""
    tn = _pick_tile(h, target)
    while tn > 128 and 2 * h * tn * itemsize > vmem_budget:
        nxt = _pick_tile(h, tn - 128)
        if nxt >= tn:
            break
        tn = nxt
    return tn


def prepare_pooler_params(weight, bias, *, param_dtype=None):
    """One-time (model-load) parameter prep.

    weight: PyTorch nn.Linear layout [out_features, in_features].
    Transposes to [in, out] so the kernel's dot lowers directly onto the MXU
    with no per-call / per-tile weight transpose, and optionally downcasts the
    streamed weight (e.g. jnp.bfloat16) to halve the dominant HBM read.
    """
    w_t = jnp.asarray(weight).T
    if param_dtype is not None:
        w_t = w_t.astype(param_dtype)
    return w_t, jnp.asarray(bias)


def bert_pooler(hidden_states, w_t, bias, *,
                tn_target=512, vmem_budget_bytes=12 * 1024 * 1024):
    """hidden_states: [B, S, H]; w_t: [H, H] in [in, out] layout (see
    prepare_pooler_params); bias: [H].  Returns [B, H]."""
    B, S, H = hidden_states.shape
    K, N = w_t.shape
    assert K == H and N == H, "BertPooler dense is square [H, H]"

    # Tiny glue slice (B*H elements) -- negligible next to the H^2 weight read.
    first_token = hidden_states[:, 0, :]                      # [B, H]

    # Match x's dtype to the (possibly downcast) streamed weight so the MXU
    # sees a single-dtype matmul; x is tiny so this cast is free.
    if first_token.dtype != w_t.dtype:
        first_token = first_token.astype(w_t.dtype)

    # Pad batch to the compute dtype's sublane packing so output stores are
    # unmasked (f32 -> 8, bf16 -> 16, int8/fp8 -> 32).
    itemsize = jnp.dtype(first_token.dtype).itemsize
    sub = {4: 8, 2: 16, 1: 32}.get(itemsize, 8)
    B_pad = max(sub, ((B + sub - 1) // sub) * sub)
    if B_pad != B:
        first_token = jnp.pad(first_token, ((0, B_pad - B), (0, 0)))

    w_itemsize = jnp.dtype(w_t.dtype).itemsize
    tn = _pick_tn(H, w_itemsize, tn_target, vmem_budget_bytes)
    grid = (H // tn,)                 # N tiles only; full-K contraction per step

    bias2 = bias.reshape(1, H)

    out = pl.pallas_call(
        _pooler_kernel,
        out_shape=jax.ShapeDtypeStruct((B_pad, H), hidden_states.dtype),
        grid=grid,
        in_specs=[
            # x: constant block index -> fetched once, not per N tile.
            pl.BlockSpec((B_pad, H), lambda j: (0, 0)),
            # W^T ([in, out]): column slab per N tile; 2-deep buffered by default.
            pl.BlockSpec((H, tn), lambda j: (0, j)),
            # bias: N tile.
            pl.BlockSpec((1, tn), lambda j: (0, j)),
        ],
        out_specs=pl.BlockSpec((B_pad, tn), lambda j: (0, j)),
        compiler_params=pltpu.CompilerParams(
            # Single independent axis: shards the dominant weight read across
            # both TensorCores on v7x; no-op (harmless) on v5e/v6e.
            dimension_semantics=("parallel",)),
    )(first_token, w_t, bias2)

    return out[:B]


def _reference(hidden_states, weight, bias):
    first = hidden_states[:, 0, :]
    return jnp.tanh(first @ weight.T + bias)


if __name__ == "__main__":
    root = jax.random.PRNGKey(0)

    def run_case(B, S, H, atol):
        k1, k2, k3 = jax.random.split(jax.random.fold_in(root, H), 3)
        hidden_states = jax.random.normal(k1, (B, S, H), dtype=jnp.float32)
        # Deterministic "nn.Linear(H, H)" params: weight [out, in], bias [H].
        weight = jax.random.normal(k2, (H, H), dtype=jnp.float32) * 0.02
        bias = jax.random.normal(k3, (H,), dtype=jnp.float32) * 0.02

        w_t, b = prepare_pooler_params(weight, bias)   # model-load-time prep
        out = jax.block_until_ready(bert_pooler(hidden_states, w_t, b))

        ref = _reference(hidden_states, weight, bias)
        assert out.shape == (B, H)
        err = float(jnp.max(jnp.abs(out - ref)))
        assert jnp.allclose(out, ref, atol=atol, rtol=atol), f"max err {err}"

    # Small shape implied by the module (batch=2, seq=8, hidden=32).
    run_case(B=2, S=8, H=32, atol=1e-5)
    # Multi-N-tile + padded-batch path (B not a multiple of 8, H large enough
    # for >1 lane tile) -- per the review's correctness note.
    run_case(B=3, S=4, H=768, atol=5e-3)

    print("KERNEL_OK")
</pallas_src>

<mosaic_0001>
module attributes {stable_mosaic.version = 11 : i64} {
  func.func @_pooler_kernel(%arg0: i32, %arg1: memref<8x32xf32, #tpu.memory_space<vmem>>, %arg2: memref<32x32xf32, #tpu.memory_space<vmem>>, %arg3: memref<1x32xf32, #tpu.memory_space<vmem>>, %arg4: memref<8x32xf32, #tpu.memory_space<vmem>>) attributes {dimension_semantics = [#tpu.dimension_semantics<parallel>], iteration_bounds = array<i64: 1>, scalar_prefetch = 0 : i64, scratch_operands = 0 : i64, tpu.core_type = #tpu.core_type<tc>, window_params = [{pipeline_mode = #tpu.pipeline_mode<synchronous>, transform_indices = @transform_0, window_bounds = array<i64: 8, 32>}, {transform_indices = @transform_1, window_bounds = array<i64: 32, 32>}, {transform_indices = @transform_2, window_bounds = array<i64: 1, 32>}, {transform_indices = @transform_3, window_bounds = array<i64: 8, 32>}]} {
    %c0 = arith.constant 0 : index
    %c0_0 = arith.constant 0 : index
    %0 = vector.load %arg1[%c0, %c0_0] : memref<8x32xf32, #tpu.memory_space<vmem>>, vector<8x32xf32>
    %c0_1 = arith.constant 0 : index
    %c0_2 = arith.constant 0 : index
    %1 = vector.load %arg2[%c0_1, %c0_2] : memref<32x32xf32, #tpu.memory_space<vmem>>, vector<32x32xf32>
    %cst = arith.constant dense<0.000000e+00> : vector<8x32xf32>
    %2 = tpu.matmul %0, %1, %cst {dimension_numbers = #tpu.dot_dimension_numbers<[1], [0], [0], [1], [0, 0, 1, 1], [], []>} : vector<8x32xf32>, vector<32x32xf32>, vector<8x32xf32> -> vector<8x32xf32>
    %c0_3 = arith.constant 0 : index
    %c0_4 = arith.constant 0 : index
    %3 = vector.load %arg3[%c0_3, %c0_4] : memref<1x32xf32, #tpu.memory_space<vmem>>, vector<1x32xf32>
    %4 = vector.broadcast %3 : vector<1x32xf32> to vector<8x32xf32>
    %5 = arith.addf %2, %4 : vector<8x32xf32>
    %6 = math.tanh %5 : vector<8x32xf32>
    %c0_5 = arith.constant 0 : index
    %c0_6 = arith.constant 0 : index
    %7 = vector.load %arg4[%c0_5, %c0_6] : memref<8x32xf32, #tpu.memory_space<vmem>>, vector<8x32xf32>
    tpu.vector_store %arg4[%c0_5, %c0_6], %6 {strides = array<i32>} : memref<8x32xf32, #tpu.memory_space<vmem>>, vector<8x32xf32>,
    return
  }
  func.func @transform_0(%arg0: i32) -> (i32, i32) {
    %c0_i32 = arith.constant 0 : i32
    %c0_i32_0 = arith.constant 0 : i32
    %c0_i32_1 = arith.constant 0 : i32
    return %c0_i32, %c0_i32_0 : i32, i32
  }
  func.func @transform_1(%arg0: i32) -> (i32, i32) {
    %c0_i32 = arith.constant 0 : i32
    %c0_i32_0 = arith.constant 0 : i32
    return %c0_i32, %arg0 : i32, i32
  }
  func.func @transform_2(%arg0: i32) -> (i32, i32) {
    %c0_i32 = arith.constant 0 : i32
    %c0_i32_0 = arith.constant 0 : i32
    return %c0_i32, %arg0 : i32, i32
  }
  func.func @transform_3(%arg0: i32) -> (i32, i32) {
    %c0_i32 = arith.constant 0 : i32
    %c0_i32_0 = arith.constant 0 : i32
    return %c0_i32, %arg0 : i32, i32
  }
}

</mosaic_0001>

<llo_original>
// kernel: tpu_custom_call.1
$region0: #{tpu_custom_call.1}
  #allocation0 [shape = 'u32[]', space=smem, size = 0x4, offset = 0x4, fixed_abs, tag = 'smem constant byte address 0x4 - core index']
  #allocation1 [shape = 'u32[144,128]{1,0:T(1,128)}', space=vmem, size = 0x12000, scoped, tag = 'internal scratch']
  %s0 = inlined_call_operand.hbm [shape: f32[8,32], index: 0, kind: input, shape index: {}]
  %s1 = inlined_call_operand.hbm [shape: f32[32,32], index: 1, kind: input, shape index: {}]
  %s2 = inlined_call_operand.vmem [shape: f32[1,32], index: 2, kind: input, shape index: {}]
  %s3 = inlined_call_operand.hbm [shape: f32[8,32], index: 3, kind: output, shape index: {}]
  %s4 = sld [smem:[#allocation0]]
  $region30: #{tpu_custom_call.1} parent=0
    _
  %s6 = ssub.s32 1, %s4
  %s7 = scalar_select 0, %s6, %s4
  $region1: #{tpu_custom_call.1} parent=0
    #allocation2 [shape = 'u8[4096]{0}', space=vmem, size = 0x1000, scoped, tag = 'input window, operand 0, single buffered']
    #allocation3 [shape = 's32[1]{0}', space=sflag, size = 0x4, scoped, tag = 'scoped memory for tpu_custom_call.1']
    #allocation4 [shape = 's32[1]{0}', space=sflag, size = 0x4, scoped, tag = 'scoped memory for tpu_custom_call.1']
    #allocation5 [shape = 'u8[16384]{0}', space=vmem, size = 0x4000, scoped, tag = 'input window, operand 1, single buffered']
    #allocation6 [shape = 's32[1]{0}', space=sflag, size = 0x4, scoped, tag = 'scoped memory for tpu_custom_call.1']
    #allocation7 [shape = 'u8[4096]{0}', space=vmem, size = 0x1000, scoped, tag = 'output window, operand 0, single buffered']
    %8 = vsyncpa [#allocation3], 0
    %9 = vsyncpa [#allocation6], 0
    %10 = vsyncpa [#allocation4], 0
    // Predicated region
    $region2: #{tpu_custom_call.1} parent=1 // pred_check
      _
    $region3: #{tpu_custom_call.1} parent=1 // pred_check_branch
      %12 = sbr.rel (0) target = $region5
    $region4: #{tpu_custom_call.1} parent=1 // pred_region
      %s14 = ssub.s32 128, 128
      %15 = vsyncadd [#allocation3], %s14
      %s17 = sshll.u32 [#allocation2], 4
      %s18 = int_to_ptr.vmem [resolvable:$true] %s17
      %20 = dma.hbm_to_vmem [thread:$0]  %s0, 128, %s18, [#allocation3]
    $region5: #{tpu_custom_call.1} parent=1 // pred_fallthru
      _
    // Predicated region
    $region6: #{tpu_custom_call.1} parent=1 // pred_check
      _
    $region7: #{tpu_custom_call.1} parent=1 // pred_check_branch
      %22 = sbr.rel (0) target = $region9
    $region8: #{tpu_custom_call.1} parent=1 // pred_region
      %s24 = ssub.s32 512, 512
      %25 = vsyncadd [#allocation6], %s24
      %s26 = sshll.u32 [#allocation5], 4
      %s27 = int_to_ptr.vmem [resolvable:$true] %s26
      %32 = dma.hbm_to_vmem [thread:$0]  %s1, 512, %s27, [#allocation6], 128, 128, 8
    $region9: #{tpu_custom_call.1} parent=1 // pred_fallthru
      _
    // Predicated region
    $region10: #{tpu_custom_call.1} parent=1 // pred_check
      _
    $region11: #{tpu_custom_call.1} parent=1 // pred_check_branch
      %34 = sbr.rel (0) target = $region13
    $region12: #{tpu_custom_call.1} parent=1 // pred_region
      _
    $region13: #{tpu_custom_call.1} parent=1 // pred_fallthru
      _
    // Predicated region
    $region14: #{tpu_custom_call.1} parent=1 // pred_check
      _
    $region15: #{tpu_custom_call.1} parent=1 // pred_check_branch
      %36 = sbr.rel (0) target = $region17
    $region16: #{tpu_custom_call.1} parent=1 // pred_region
      %37 = dma.done [#allocation3], 128
    $region17: #{tpu_custom_call.1} parent=1 // pred_fallthru
      _
    // Predicated region
    $region18: #{tpu_custom_call.1} parent=1 // pred_check
      _
    $region19: #{tpu_custom_call.1} parent=1 // pred_check_branch
      %39 = sbr.rel (0) target = $region21
    $region20: #{tpu_custom_call.1} parent=1 // pred_region
      %40 = dma.done [#allocation6], 512
    $region21: #{tpu_custom_call.1} parent=1 // pred_fallthru
      _
    %v41 = vld [vmem:[#allocation2] sm:$0xff]
    %v42 = vld [vmem:[#allocation5] sm:$0xff]
    %v43 = vld [vmem:[#allocation5 + $0x8] sm:$0xff]
    %v44 = vld [vmem:[#allocation5 + $0x10] sm:$0xff]
    %v45 = vld [vmem:[#allocation5 + $0x18] sm:$0xff]
    %v46 = vld [vmem:[%s2] sm:$0x1]
    %v48 = vlaneseq
    %v49 = vshrl.u32 %v48, 7
    %v50 = vsub.s32 0, %v49
    %v51 = vrot.slane %v46, %v50
    %vm53 = vcmask 261120
    %v55 = vsel %vm53, %v41, 0
    %57 = vmatprep.subr.mxu0 0.0
    %58 = vmatpush1.msra.mxu0 %v42
    %59 = vmatprep.subr.mxu0 0.0
    %60 = vmatpush1.msra.mxu0 %v43
    %61 = vmatprep.subr.mxu0 0.0
    %62 = vmatpush1.msra.mxu0 %v44
    %63 = vmatprep.subr.mxu0 0.0
    %64 = vmatpush1.msra.mxu0 %v45
    %65 = vmatprep.subr.mxu0 0.0
    %66 = vmatpush1.msra.mxu0 0.0
    %67 = vmatprep.subr.mxu0 0.0
    %68 = vmatpush1.msra.mxu0 0.0
    %69 = vmatprep.subr.mxu0 0.0
    %70 = vmatpush1.msra.mxu0 0.0
    %71 = vmatprep.subr.mxu0 0.0
    %72 = vmatpush1.msra.mxu0 0.0
    %73 = vmatprep.subr.mxu0 0.0
    %74 = vmatpush1.msra.mxu0 0.0
    %75 = vmatprep.subr.mxu0 0.0
    %76 = vmatpush1.msra.mxu0 0.0
    %77 = vmatprep.subr.mxu0 0.0
    %78 = vmatpush1.msra.mxu0 0.0
    %79 = vmatprep.subr.mxu0 0.0
    %80 = vmatpush1.msra.mxu0 0.0
    %81 = vmatprep.subr.mxu0 0.0
    %82 = vmatpush1.msra.mxu0 0.0
    %83 = vmatprep.subr.mxu0 0.0
    %84 = vmatpush1.msra.mxu0 0.0
    %85 = vmatprep.subr.mxu0 0.0
    %86 = vmatpush1.msra.mxu0 0.0
    %87 = vmatprep.subr.mxu0 0.0
    %88 = vmatpush1.msra.mxu0 0.0
    %89 = vmatprep.subr.mxu0 0.0
    %90 = vmatpush1.msra.mxu0 0.0
    %91 = vmatprep.subr.mxu0 0.0
    %92 = vmatpush1.msra.mxu0 0.0
    %93 = vmatprep.subr.mxu0 0.0
    %94 = vmatpush1.msra.mxu0 0.0
    %95 = vmatprep.subr.mxu0 0.0
    %96 = vmatpush1.msra.mxu0 0.0
    %97 = vmatprep.subr.mxu0 0.0
    %98 = vmatpush1.msra.mxu0 0.0
    %99 = vmatprep.subr.mxu0 0.0
    %100 = vmatpush1.msra.mxu0 0.0
    %101 = vmatprep.subr.mxu0 0.0
    %102 = vmatpush1.msra.mxu0 0.0
    %103 = vmatprep.subr.mxu0 0.0
    %104 = vmatpush1.msra.mxu0 0.0
    %105 = vmatprep.subr.mxu0 0.0
    %106 = vmatpush1.msra.mxu0 0.0
    %107 = vmatprep.subr.mxu0 0.0
    %108 = vmatpush1.msra.mxu0 0.0
    %109 = vmatprep.subr.mxu0 0.0
    %110 = vmatpush1.msra.mxu0 0.0
    %111 = vmatprep.subr.mxu0 0.0
    %112 = vmatpush1.msra.mxu0 0.0
    %113 = vmatprep.subr.mxu0 0.0
    %114 = vmatpush1.msra.mxu0 0.0
    %115 = vmatprep.subr.mxu0 0.0
    %116 = vmatpush1.msra.mxu0 0.0
    %117 = vmatprep.subr.mxu0 0.0
    %118 = vmatpush1.msra.mxu0 0.0
    %119 = vmatprep.subr.mxu0 0.0
    %120 = vmatpush1.msra.mxu0 0.0
    %121 = vmatprep.mubr.f32.mxu0 0.0
    %122 = vmatmul.mubr.f32.gmra.mrb[0].mxu0 %v55
    %v123 = vpop.f32.mrb[0].mxu0
    %v124 = vadd.f32 %v51, %v123
    %v125 = vpop.f32.mrb[0].mxu0
    %126 = vdwg.mxu0
    %v127 = vtanh.pop %v124
    %128 = vst.msk [vmem:[#allocation7] sm:$0xff] %vm53, %v127
    // Predicated region
    $region22: #{tpu_custom_call.1} parent=1 // pred_check
      _
    $region23: #{tpu_custom_call.1} parent=1 // pred_check_branch
      %130 = sbr.rel (0) target = $region25
    $region24: #{tpu_custom_call.1} parent=1 // pred_region
      %s132 = ssub.s32 128, 128
      %133 = vsyncadd [#allocation4], %s132
      %s135 = sshll.u32 [#allocation7], 4
      %s136 = int_to_ptr.vmem [resolvable:$true] %s135
      %138 = dma.vmem_to_hbm [thread:$0]  %s136, 128, %s3, [#allocation4]
    $region25: #{tpu_custom_call.1} parent=1 // pred_fallthru
      _
    // Predicated region
    $region26: #{tpu_custom_call.1} parent=1 // pred_check
      _
    $region27: #{tpu_custom_call.1} parent=1 // pred_check_branch
      %140 = sbr.rel (0) target = $region29
    $region28: #{tpu_custom_call.1} parent=1 // pred_region
      %141 = dma.done [#allocation4], 128
    $region29: #{tpu_custom_call.1} parent=1 // pred_fallthru
      _
    %142 = vsyncpa [#allocation3], 1
    %143 = vsyncpa [#allocation6], 1
    %144 = vsyncpa [#allocation4], 1

</llo_original>
